<compile_context>
chip_gen: v6e
topology: v6e:2x2x1
jax: 0.10.0
libtpu: 0.0.40
codegen_flags: <defaults>
</compile_context>

<pallas_src>
import functools

import jax
import jax.numpy as jnp
from jax import lax
from jax.experimental import pallas as pl
from jax.experimental.pallas import tpu as pltpu

HIDDEN = 200        # nn.Linear(features, 200)
HIDDEN_PAD = 208    # padded to a multiple of 16 (bf16 sublane packing)


def policy_net_kernel(x_ref, w1_ref, b1_ref, w2_ref, b2_ref, o_ref):
    """One batch tile; batch lives on the lane axis of all intermediates.

    x  : (TB, F) f32   streamed observation tile, natural layout
    w1 : (H, F)  bf16  resident l1.weight (hidden zero-padded to H=208)
    b1 : (H, 1)  f32   resident l1.bias column
    w2 : (1, H)  bf16  resident l2.weight row
    b2 : (1,)    f32   l2.bias scalar (SMEM)
    o  : (1, TB) f32   lane-dense output row
    """
    x_bf16 = x_ref[...].astype(jnp.bfloat16)                     # (TB, F)

    # ---- hidden^T = W1 @ x^T on the MXU (transpose folded into dot_general,
    #      no wrapper-side or explicit XLU transpose pass) ------------------
    h = lax.dot_general(
        w1_ref[...], x_bf16,
        dimension_numbers=(((1,), (1,)), ((), ())),              # contract F with F
        preferred_element_type=jnp.float32)                      # (H, TB) f32

    # ---- bias + relu in f32 on the VPU (portable: v5e has no bf16 VALU) ---
    h = jnp.maximum(h + b1_ref[...], 0.0)                        # (H, TB) f32

    # ---- layer 2 on the MXU: (1,H) @ (H,TB) -> (1,TB) ----------------------
    z = jnp.dot(w2_ref[...], h.astype(jnp.bfloat16),
                preferred_element_type=jnp.float32)              # (1, TB) f32
    z = z + b2_ref[0]

    # ---- sigmoid: EUP exp + exact reciprocal (tiny: 8 vregs per tile) ------
    o_ref[...] = pl.reciprocal(1.0 + jnp.exp(-z))


@functools.partial(jax.jit, static_argnames=("tile_b",))
def policy_net_forward(x, w1, b1, w2, b2, *, tile_b=2048):
    """Fused PolicyNet forward.  x: (B, F) f32  ->  (B, 1) f32."""
    B, F = x.shape
    H = w1.shape[0]

    # Batch tile: multiple of 128 lanes; aim for >= 2 grid steps (v7x dual TC).
    half = ((pl.cdiv(B, 2) + 127) // 128) * 128
    tb = max(128, (min(tile_b, half) // 128) * 128)
    num_tiles = pl.cdiv(B, tb)
    b_pad = num_tiles * tb           # output padded; trailing x block is a
                                     # standard Pallas padded (masked) block.

    out_row = pl.pallas_call(
        policy_net_kernel,
        out_shape=jax.ShapeDtypeStruct((1, b_pad), jnp.float32),
        grid_spec=pltpu.PrefetchScalarGridSpec(
            num_scalar_prefetch=0,
            grid=(num_tiles,),
            in_specs=[
                pl.BlockSpec((tb, F), lambda i: (i, 0)),            # x tile (streams)
                pl.BlockSpec((H, F), lambda i: (0, 0)),             # W1 (VMEM resident)
                pl.BlockSpec((H, 1), lambda i: (0, 0)),             # b1 (VMEM resident)
                pl.BlockSpec((1, H), lambda i: (0, 0)),             # w2 row (resident)
                pl.BlockSpec(memory_space=pltpu.MemorySpace.SMEM),  # b2 scalar
            ],
            out_specs=pl.BlockSpec((1, tb), lambda i: (0, i)),      # lane-dense output
        ),
        compiler_params=pltpu.CompilerParams(
            dimension_semantics=("parallel",),   # shard batch tiles across TCs (v7x)
        ),
    )(x, w1, b1, w2, b2)

    # Padded batch columns hold garbage — slice them off right here.
    return out_row[0, :B].reshape(B, 1)


def init_params(key, features, hidden=HIDDEN, hidden_pad=HIDDEN_PAD):
    """PyTorch nn.Linear-style init (U[-1/sqrt(fan_in), 1/sqrt(fan_in)]),
    stored in the kernel's layout with the hidden dim zero-padded to 208."""
    k1, k2, k3, k4 = jax.random.split(key, 4)
    bound1 = 1.0 / float(features) ** 0.5
    bound2 = 1.0 / float(hidden) ** 0.5
    # PyTorch layouts: l1.weight (hidden,F), l1.bias (hidden,), l2.weight (1,hidden), l2.bias (1,)
    w1 = jax.random.uniform(k1, (hidden, features), jnp.float32, -bound1, bound1)
    b1 = jax.random.uniform(k2, (hidden,), jnp.float32, -bound1, bound1)
    w2 = jax.random.uniform(k3, (hidden,), jnp.float32, -bound2, bound2)
    b2 = jax.random.uniform(k4, (1,), jnp.float32, -bound2, bound2)
    # Zero-pad hidden 200 -> 208: padded units give relu(0*x + 0) = 0 and have
    # zero l2 weight, so the math is unchanged.
    w1p = jnp.zeros((hidden_pad, features), jnp.float32).at[:hidden].set(w1)
    b1c = jnp.zeros((hidden_pad, 1), jnp.float32).at[:hidden, 0].set(b1)
    w2r = jnp.zeros((1, hidden_pad), jnp.float32).at[0, :hidden].set(w2)
    return w1p.astype(jnp.bfloat16), b1c, w2r.astype(jnp.bfloat16), b2


if __name__ == "__main__":
    key = jax.random.PRNGKey(0)
    k_x, k_p = jax.random.split(key)

    B, F = 200, 32  # batch (exercises 2 tiles + a ragged last tile), features
    x = jax.random.normal(k_x, (B, F), dtype=jnp.float32)
    w1, b1, w2, b2 = init_params(k_p, F)

    out = jax.block_until_ready(policy_net_forward(x, w1, b1, w2, b2))

    # Pure-JAX reference of the same math (bf16 MXU operands, f32 elsewhere).
    xb = x.astype(jnp.bfloat16).astype(jnp.float32)
    w1f = w1.astype(jnp.float32)
    h_ref = jnp.maximum(xb @ w1f.T + b1[:, 0], 0.0)
    h_bf = h_ref.astype(jnp.bfloat16).astype(jnp.float32)
    z_ref = h_bf @ w2[0].astype(jnp.float32) + b2[0]
    ref = jax.nn.sigmoid(z_ref).reshape(B, 1)

    assert out.shape == (B, 1)
    max_err = float(jnp.max(jnp.abs(out - ref)))
    assert jnp.allclose(out, ref, atol=1e-2, rtol=1e-2), max_err
    print("KERNEL_OK")
</pallas_src>

<mosaic_0001>
module attributes {stable_mosaic.version = 11 : i64} {
  func.func @policy_net_kernel(%arg0: i32, %arg1: memref<128x32xf32, #tpu.memory_space<vmem>>, %arg2: memref<208x32xbf16, #tpu.memory_space<vmem>>, %arg3: memref<208x1xf32, #tpu.memory_space<vmem>>, %arg4: memref<1x208xbf16, #tpu.memory_space<vmem>>, %arg5: memref<1xf32, #tpu.memory_space<smem>>, %arg6: memref<1x128xf32, #tpu.memory_space<vmem>>) attributes {dimension_semantics = [#tpu.dimension_semantics<parallel>], iteration_bounds = array<i64: 2>, scalar_prefetch = 0 : i64, scratch_operands = 0 : i64, tpu.core_type = #tpu.core_type<tc>, window_params = [{transform_indices = @transform_0, window_bounds = array<i64: 128, 32>}, {pipeline_mode = #tpu.pipeline_mode<synchronous>, transform_indices = @transform_1, window_bounds = array<i64: 208, 32>}, {pipeline_mode = #tpu.pipeline_mode<synchronous>, transform_indices = @transform_2, window_bounds = array<i64: 208, 1>}, {pipeline_mode = #tpu.pipeline_mode<synchronous>, transform_indices = @transform_3, window_bounds = array<i64: 1, 208>}, {transform_indices = @transform_4, window_bounds = array<i64: 1>}, {transform_indices = @transform_5, window_bounds = array<i64: 1, 128>}]} {
    %c0 = arith.constant 0 : index
    %c0_0 = arith.constant 0 : index
    %0 = vector.load %arg1[%c0, %c0_0] : memref<128x32xf32, #tpu.memory_space<vmem>>, vector<128x32xf32>
    %1 = arith.truncf %0 : vector<128x32xf32> to vector<128x32xbf16>
    %c0_1 = arith.constant 0 : index
    %c0_2 = arith.constant 0 : index
    %2 = vector.load %arg2[%c0_1, %c0_2] : memref<208x32xbf16, #tpu.memory_space<vmem>>, vector<208x32xbf16>
    %cst = arith.constant dense<0.000000e+00> : vector<208x128xf32>
    %3 = tpu.matmul %2, %1, %cst {dimension_numbers = #tpu.dot_dimension_numbers<[1], [1], [0], [0], [0, 0, 1, 0], [], []>} : vector<208x32xbf16>, vector<128x32xbf16>, vector<208x128xf32> -> vector<208x128xf32>
    %c0_3 = arith.constant 0 : index
    %c0_4 = arith.constant 0 : index
    %4 = vector.load %arg3[%c0_3, %c0_4] : memref<208x1xf32, #tpu.memory_space<vmem>>, vector<208x1xf32>
    %5 = vector.broadcast %4 : vector<208x1xf32> to vector<208x128xf32>
    %6 = arith.addf %3, %5 : vector<208x128xf32>
    %cst_5 = arith.constant 0.000000e+00 : f32
    %7 = vector.broadcast %cst_5 : f32 to vector<208x128xf32>
    %8 = arith.maximumf %6, %7 : vector<208x128xf32>
    %c0_6 = arith.constant 0 : index
    %c0_7 = arith.constant 0 : index
    %9 = vector.load %arg4[%c0_6, %c0_7] : memref<1x208xbf16, #tpu.memory_space<vmem>>, vector<1x208xbf16>
    %10 = arith.truncf %8 : vector<208x128xf32> to vector<208x128xbf16>
    %cst_8 = arith.constant dense<0.000000e+00> : vector<1x128xf32>
    %11 = tpu.matmul %9, %10, %cst_8 {dimension_numbers = #tpu.dot_dimension_numbers<[1], [0], [0], [1], [0, 0, 1, 1], [], []>} : vector<1x208xbf16>, vector<208x128xbf16>, vector<1x128xf32> -> vector<1x128xf32>
    %c0_9 = arith.constant 0 : index
    %12 = memref.load %arg5[%c0_9] : memref<1xf32, #tpu.memory_space<smem>>
    %13 = vector.broadcast %12 : f32 to vector<1x128xf32>
    %14 = arith.addf %11, %13 : vector<1x128xf32>
    %cst_10 = arith.constant 0.000000e+00 : f32
    %15 = vector.broadcast %cst_10 : f32 to vector<1x128xf32>
    %16 = arith.subf %15, %14 : vector<1x128xf32>
    %17 = math.exp %16 : vector<1x128xf32>
    %cst_11 = arith.constant 1.000000e+00 : f32
    %18 = vector.broadcast %cst_11 : f32 to vector<1x128xf32>
    %19 = arith.addf %18, %17 : vector<1x128xf32>
    %20 = tpu.reciprocal %19 : vector<1x128xf32> -> vector<1x128xf32>
    %c0_12 = arith.constant 0 : index
    %c0_13 = arith.constant 0 : index
    %21 = vector.load %arg6[%c0_12, %c0_13] : memref<1x128xf32, #tpu.memory_space<vmem>>, vector<1x128xf32>
    tpu.vector_store %arg6[%c0_12, %c0_13], %20 {strides = array<i32>} : memref<1x128xf32, #tpu.memory_space<vmem>>, vector<1x128xf32>,
    return
  }
  func.func @transform_0(%arg0: i32) -> (i32, i32) {
    %c0_i32 = arith.constant 0 : i32
    %c0_i32_0 = arith.constant 0 : i32
    return %arg0, %c0_i32 : i32, i32
  }
  func.func @transform_1(%arg0: i32) -> (i32, i32) {
    %c0_i32 = arith.constant 0 : i32
    %c0_i32_0 = arith.constant 0 : i32
    %c0_i32_1 = arith.constant 0 : i32
    return %c0_i32, %c0_i32_0 : i32, i32
  }
  func.func @transform_2(%arg0: i32) -> (i32, i32) {
    %c0_i32 = arith.constant 0 : i32
    %c0_i32_0 = arith.constant 0 : i32
    %c0_i32_1 = arith.constant 0 : i32
    return %c0_i32, %c0_i32_0 : i32, i32
  }
  func.func @transform_3(%arg0: i32) -> (i32, i32) {
    %c0_i32 = arith.constant 0 : i32
    %c0_i32_0 = arith.constant 0 : i32
    %c0_i32_1 = arith.constant 0 : i32
    return %c0_i32, %c0_i32_0 : i32, i32
  }
  func.func @transform_4(%arg0: i32) -> i32 {
    %c0_i32 = arith.constant 0 : i32
    %c0_i32_0 = arith.constant 0 : i32
    return %c0_i32 : i32
  }
  func.func @transform_5(%arg0: i32) -> (i32, i32) {
    %c0_i32 = arith.constant 0 : i32
    %c0_i32_0 = arith.constant 0 : i32
    return %c0_i32, %arg0 : i32, i32
  }
}

</mosaic_0001>

<llo_original>
// kernel: policy_net_forward.1
$region0: #{policy_net_forward.1}
  #allocation0 [shape = 'u32[]', space=smem, size = 0x4, offset = 0x4, fixed_abs, tag = 'smem constant byte address 0x4 - core index']
  #allocation1 [shape = 'u32[144,128]{1,0:T(1,128)}', space=vmem, size = 0x12000, scoped, tag = 'internal scratch']
  #allocation2 [shape = 'f32[1]{0:T(128)S(6)}', space=smem, size = 0x200, scoped, tag = 'scoped memory for policy_net_forward.1']
  %s0 = inlined_call_operand.vmem [shape: f32[200,32], index: 0, kind: input, shape index: {}]
  %s1 = inlined_call_operand.vmem [shape: bf16[208,32], index: 1, kind: input, shape index: {}]
  %s2 = inlined_call_operand.vmem [shape: f32[208,1], index: 2, kind: input, shape index: {}]
  %s3 = inlined_call_operand.vmem [shape: bf16[1,208], index: 3, kind: input, shape index: {}]
  %s4 = inlined_call_operand.<no memory space> [shape: f32[1], index: 4, kind: input, shape index: {}]
  %s5 = inlined_call_operand.vmem [shape: f32[1,256], index: 5, kind: output, shape index: {}]
  %s6 = sld [smem:[#allocation0]]
  $region53: #{policy_net_forward.1} parent=0
    _
  %s8 = ssub.s32 1, %s6
  %s9 = scalar_select 0, %s8, %s6
  %10 = sst [smem:[#allocation2]] %s4
  loop: start=0, step=1, limit=4
  $region2: #{policy_net_forward.1} parent=0 // loop_pre_header
    _
  $region3: #{policy_net_forward.1} parent=0 // loop_header
    %s12 = sphi 0, %s16
    %p13 = scmp.ge.s32.totalorder %s12, 4
    %s22 = sphi 0, %s24
    %s25 = sphi 0, %s22
    %s26 = sphi 0, %s25
    %s42 = sphi 0, %s26
    %s46 = sphi 0, %s46
    %s48 = sphi 0, %s46
    %s49 = sphi 0, %s48
    %s63 = sphi 0, %s49
    %s67 = sphi 0, %s67
    %s69 = sphi 0, %s67
    %s70 = sphi 0, %s69
    %s84 = sphi 0, %s70
    %s88 = sphi 0, %s88
    %s90 = sphi 0, %s88
    %s91 = sphi 0, %s90
    %s105 = sphi 0, %s91
    %s109 = sphi 0, %s109
    %s111 = sphi 0, %s109
    %s112 = sphi 0, %s111
    %s126 = sphi 0, %s112
    %s132 = sphi 0, %s134
    %s135 = sphi 0, %s132
    %s136 = sphi 0, %s135
    %s152 = sphi 0, %s136
  $region4: #{policy_net_forward.1} parent=0 // loop_header_branch
    %15 = sbr.rel (%p13) target = $region8
  $region5: #{policy_net_forward.1} parent=0 // loop_body
    %s17 = ssub.s32 %s12, 1
    %s18 = ssub.s32 %s12, 2
    %s19 = sadd.s32 %s12, 1
    %s20 = ssub.s32 %s12, %s19
    %p21 = scmp.eq.s32.totalorder %s20, 0
    %s23 = sadd.s32 %s22, 1
    %s24 = scalar_select %p21, %s22, %s23
    %p27 = pneg %p21
    %p28 = scmp.eq.s32.totalorder %s12, 1
    %p29 = por %p27, %p28
    %p30 = scmp.ne.s32.totalorder %s22, %s25
    %p31 = scmp.eq.s32.totalorder %s12, 0
    %p32 = por %p30, %p31
    %p33 = scmp.ne.s32.totalorder %s22, %s25
    %p34 = scmp.eq.s32.totalorder %s17, 1
    %p35 = por %p33, %p34
    %p36 = scmp.ne.s32.totalorder %s25, %s26
    %p37 = scmp.eq.s32.totalorder %s17, 0
    %p38 = por %p36, %p37
    %p39 = scmp.ne.s32.totalorder %s25, %s26
    %p40 = scmp.eq.s32.totalorder %s18, 1
    %p41 = por %p39, %p40
    %p43 = scmp.ne.s32.totalorder %s26, %s42
    %p44 = scmp.eq.s32.totalorder %s18, 0
    %p45 = por %p43, %p44
    %s47 = sadd.s32 %s46, 1
    %p50 = scmp.eq.s32.totalorder %s12, 1
    %p51 = scmp.ne.s32.totalorder %s46, %s48
    %p52 = scmp.eq.s32.totalorder %s12, 0
    %p53 = por %p51, %p52
    %p54 = scmp.ne.s32.totalorder %s46, %s48
    %p55 = scmp.eq.s32.totalorder %s17, 1
    %p56 = por %p54, %p55
    %p57 = scmp.ne.s32.totalorder %s48, %s49
    %p58 = scmp.eq.s32.totalorder %s17, 0
    %p59 = por %p57, %p58
    %p60 = scmp.ne.s32.totalorder %s48, %s49
    %p61 = scmp.eq.s32.totalorder %s18, 1
    %p62 = por %p60, %p61
    %p64 = scmp.ne.s32.totalorder %s49, %s63
    %p65 = scmp.eq.s32.totalorder %s18, 0
    %p66 = por %p64, %p65
    %s68 = sadd.s32 %s67, 1
    %p71 = scmp.eq.s32.totalorder %s12, 1
    %p72 = scmp.ne.s32.totalorder %s67, %s69
    %p73 = scmp.eq.s32.totalorder %s12, 0
    %p74 = por %p72, %p73
    %p75 = scmp.ne.s32.totalorder %s67, %s69
    %p76 = scmp.eq.s32.totalorder %s17, 1
    %p77 = por %p75, %p76
    %p78 = scmp.ne.s32.totalorder %s69, %s70
    %p79 = scmp.eq.s32.totalorder %s17, 0
    %p80 = por %p78, %p79
    %p81 = scmp.ne.s32.totalorder %s69, %s70
    %p82 = scmp.eq.s32.totalorder %s18, 1
    %p83 = por %p81, %p82
    %p85 = scmp.ne.s32.totalorder %s70, %s84
    %p86 = scmp.eq.s32.totalorder %s18, 0
    %p87 = por %p85, %p86
    %s89 = sadd.s32 %s88, 1
    %p92 = scmp.eq.s32.totalorder %s12, 1
    %p93 = scmp.ne.s32.totalorder %s88, %s90
    %p94 = scmp.eq.s32.totalorder %s12, 0
    %p95 = por %p93, %p94
    %p96 = scmp.ne.s32.totalorder %s88, %s90
    %p97 = scmp.eq.s32.totalorder %s17, 1
    %p98 = por %p96, %p97
    %p99 = scmp.ne.s32.totalorder %s90, %s91
    %p100 = scmp.eq.s32.totalorder %s17, 0
    %p101 = por %p99, %p100
    %p102 = scmp.ne.s32.totalorder %s90, %s91
    %p103 = scmp.eq.s32.totalorder %s18, 1
    %p104 = por %p102, %p103
    %p106 = scmp.ne.s32.totalorder %s91, %s105
    %p107 = scmp.eq.s32.totalorder %s18, 0
    %p108 = por %p106, %p107
    %s110 = sadd.s32 %s109, 1
    %p113 = scmp.eq.s32.totalorder %s12, 1
    %p114 = scmp.ne.s32.totalorder %s109, %s111
    %p115 = scmp.eq.s32.totalorder %s12, 0
    %p116 = por %p114, %p115
    %p117 = scmp.ne.s32.totalorder %s109, %s111
    %p118 = scmp.eq.s32.totalorder %s17, 1
    %p119 = por %p117, %p118
    %p120 = scmp.ne.s32.totalorder %s111, %s112
    %p121 = scmp.eq.s32.totalorder %s17, 0
    %p122 = por %p120, %p121
    %p123 = scmp.ne.s32.totalorder %s111, %s112
    %p124 = scmp.eq.s32.totalorder %s18, 1
    %p125 = por %p123, %p124
    %p127 = scmp.ne.s32.totalorder %s112, %s126
    %p128 = scmp.eq.s32.totalorder %s18, 0
    %p129 = por %p127, %p128
    %s130 = ssub.s32 %s12, %s19
    %p131 = scmp.eq.s32.totalorder %s130, 0
    %s133 = sadd.s32 %s132, 1
    %s134 = scalar_select %p131, %s132, %s133
    %p137 = pneg %p131
    %p138 = scmp.eq.s32.totalorder %s12, 1
    %p139 = por %p137, %p138
    %p140 = scmp.ne.s32.totalorder %s132, %s135
    %p141 = scmp.eq.s32.totalorder %s12, 0
    %p142 = por %p140, %p141
    %p143 = scmp.ne.s32.totalorder %s132, %s135
    %p144 = scmp.eq.s32.totalorder %s17, 1
    %p145 = por %p143, %p144
    %p146 = scmp.ne.s32.totalorder %s135, %s136
    %p147 = scmp.eq.s32.totalorder %s17, 0
    %p148 = por %p146, %p147
    %p149 = scmp.ne.s32.totalorder %s135, %s136
    %p150 = scmp.eq.s32.totalorder %s18, 1
    %p151 = por %p149, %p150
    %p153 = scmp.ne.s32.totalorder %s136, %s152
    %p154 = scmp.eq.s32.totalorder %s18, 0
    %p155 = por %p153, %p154
    %p156 = scmp.le.s32.totalorder 1, %s12
    %p157 = scmp.lt.s32.totalorder %s12, 3
    %p158 = pnand %p156, %p157
    %p159 = pneg %p158
    // Predicated region
    $region9: #{policy_net_forward.1} parent=5 // pred_check
      _
    $region10: #{policy_net_forward.1} parent=5 // pred_check_branch
      %161 = sbr.rel (%p158) target = $region12
    $region11: #{policy_net_forward.1} parent=5 // pred_region
      %s162 = ssub.s32 %s12, 1
      // Predicated region
      $region13: #{policy_net_forward.1} parent=11 // pred_check
        %p163 = pneg %p59
      $region14: #{policy_net_forward.1} parent=11 // pred_check_branch
        %165 = sbr.rel (%p163) target = $region16
      $region15: #{policy_net_forward.1} parent=11 // pred_region
        _
      $region16: #{policy_net_forward.1} parent=11 // pred_fallthru
        _
      // Predicated region
      $region17: #{policy_net_forward.1} parent=11 // pred_check
        %p166 = pneg %p80
      $region18: #{policy_net_forward.1} parent=11 // pred_check_branch
        %168 = sbr.rel (%p166) target = $region20
      $region19: #{policy_net_forward.1} parent=11 // pred_region
        _
      $region20: #{policy_net_forward.1} parent=11 // pred_fallthru
        _
      // Predicated region
      $region21: #{policy_net_forward.1} parent=11 // pred_check
        %p169 = pneg %p101
      $region22: #{policy_net_forward.1} parent=11 // pred_check_branch
        %171 = sbr.rel (%p169) target = $region24
      $region23: #{policy_net_forward.1} parent=11 // pred_region
        _
      $region24: #{policy_net_forward.1} parent=11 // pred_fallthru
        _
      // Predicated region
      $region25: #{policy_net_forward.1} parent=11 // pred_check
        %p172 = pneg %p122
      $region26: #{policy_net_forward.1} parent=11 // pred_check_branch
        %174 = sbr.rel (%p172) target = $region28
      $region27: #{policy_net_forward.1} parent=11 // pred_region
        _
      $region28: #{policy_net_forward.1} parent=11 // pred_fallthru
        _
    $region12: #{policy_net_forward.1} parent=5 // pred_fallthru
      _
    %p175 = scmp.lt.s32.totalorder %s12, 2
    // Predicated region
    $region29: #{policy_net_forward.1} parent=5 // pred_check
      %p176 = pneg %p175
    $region30: #{policy_net_forward.1} parent=5 // pred_check_branch
      %178 = sbr.rel (%p176) target = $region32
    $region31: #{policy_net_forward.1} parent=5 // pred_region
      // Predicated region
      $region33: #{policy_net_forward.1} parent=31 // pred_check
        %p179 = pneg %p32
      $region34: #{policy_net_forward.1} parent=31 // pred_check_branch
        %181 = sbr.rel (%p179) target = $region36
      $region35: #{policy_net_forward.1} parent=31 // pred_region
        %s182 = smul.u32 16, %s12
        %s183 = ssub.s32 25, %s182
        %p184 = scmp.lt.s32.totalorder %s183, 16
        %s185 = scalar_select %p184, %s183, 16
        %s186 = smul.u32 128, %s185
        %p187 = scmp.lt.s32.totalorder %s182, 24
        %s188 = scalar_select %p187, %s182, 24
        %s189 = smul.addr %s188, 8
        %s190 = scalar_lea.vmem %s0, %s189
        %s191 = smul.u32 16, %s12
        %s192 = ssub.s32 25, %s191
        %p193 = scmp.lt.s32.totalorder %s192, 16
        %s194 = scalar_select %p193, %s192, 16
        %s195 = smul.u32 128, %s194
      $region36: #{policy_net_forward.1} parent=31 // pred_fallthru
        _
    $region32: #{policy_net_forward.1} parent=5 // pred_fallthru
      _
    %p196 = scmp.le.s32.totalorder 1, %s12
    %p197 = scmp.lt.s32.totalorder %s12, 3
    %p198 = pnand %p196, %p197
    %p199 = pneg %p198
    // Predicated region
    $region37: #{policy_net_forward.1} parent=5 // pred_check
      _
    $region38: #{policy_net_forward.1} parent=5 // pred_check_branch
      %201 = sbr.rel (%p198) target = $region40
    $region39: #{policy_net_forward.1} parent=5 // pred_region
      %s202 = ssub.s32 %s12, 1
      %s203 = smul.u32 16, %s17
      %s204 = ssub.s32 25, %s203
      %p205 = scmp.lt.s32.totalorder %s204, 16
      %s206 = scalar_select %p205, %s204, 16
      %s207 = smul.u32 128, %s206
      %p208 = scmp.lt.s32.totalorder %s203, 24
      %s209 = scalar_select %p208, %s203, 24
      %s210 = smul.addr %s209, 8
      %s211 = scalar_lea.vmem %s0, %s210
      %p212 = pneg %p38
      %p213 = pneg %p35
      %p214 = pneg %p59
      %p215 = pneg %p56
      %p216 = pneg %p80
      %p217 = pneg %p77
      %p218 = pneg %p101
      %p219 = pneg %p98
      %p220 = pneg %p122
      %p221 = pneg %p119
      %p222 = pneg %p148
      %p223 = pneg %p145
      %p224 = scmp.lt.s32.totalorder %s17, 1
      %s225 = scalar_select %p224, %s17, 1
      %s226 = scalar_lea.vmem %s5, %s225
      %s227 = smul.u32 16, %s17
      %s228 = ssub.s32 25, %s227
      %p229 = scmp.lt.s32.totalorder %s228, 16
      %s230 = scalar_select %p229, %s228, 16
      %s231 = smul.u32 128, %s230
      %p232 = scmp.lt.s32.totalorder %s227, 24
      %s233 = scalar_select %p232, %s227, 24
      %s234 = smul.addr %s233, 8
      %s235 = scalar_lea.vmem %s0, %s234
      %s236 = smul.u32 16, %s17
      %s237 = ssub.s32 25, %s236
      %p238 = scmp.lt.s32.totalorder %s237, 16
      %s239 = scalar_select %p238, %s237, 16
      %s240 = smul.u32 128, %s239
      %p241 = scmp.lt.s32.totalorder %s17, 1
      %s242 = scalar_select %p241, %s17, 1
      %s243 = scalar_lea.vmem %s5, %s242
      %v245 = vld [vmem:[%s235] sm:$0xff]
      %v246 = vld [vmem:[%s235 + $0x8] sm:$0xff]
      %v247 = vld [vmem:[%s235 + $0x10] sm:$0xff]
      %v248 = vld [vmem:[%s235 + $0x18] sm:$0xff]
      %v249 = vld [vmem:[%s235 + $0x20] sm:$0xff]
      %v250 = vld [vmem:[%s235 + $0x28] sm:$0xff]
      %v251 = vld [vmem:[%s235 + $0x30] sm:$0xff]
      %v252 = vld [vmem:[%s235 + $0x38] sm:$0xff]
      %v253 = vld [vmem:[%s235 + $0x40] sm:$0xff]
      %v254 = vld [vmem:[%s235 + $0x48] sm:$0xff]
      %v255 = vld [vmem:[%s235 + $0x50] sm:$0xff]
      %v256 = vld [vmem:[%s235 + $0x58] sm:$0xff]
      %v257 = vld [vmem:[%s235 + $0x60] sm:$0xff]
      %v258 = vld [vmem:[%s235 + $0x68] sm:$0xff]
      %v259 = vld [vmem:[%s235 + $0x70] sm:$0xff]
      %v260 = vld [vmem:[%s235 + $0x78] sm:$0xff]
      %v261 = vpack.c.bf16 %v246, %v245
      %v262 = vpack.c.bf16 %v248, %v247
      %v263 = vpack.c.bf16 %v250, %v249
      %v264 = vpack.c.bf16 %v252, %v251
      %v265 = vpack.c.bf16 %v254, %v253
      %v266 = vpack.c.bf16 %v256, %v255
      %v267 = vpack.c.bf16 %v258, %v257
      %v268 = vpack.c.bf16 %v260, %v259
      %v269 = vld [vmem:[%s1] sm:$0xf]
      %v270 = vld [vmem:[%s1 + $0x4] sm:$0xf]
      %v271 = vld [vmem:[%s1 + $0x8] sm:$0xf]
      %v272 = vld [vmem:[%s1 + $0xc] sm:$0xf]
      %v273 = vld [vmem:[%s1 + $0x10] sm:$0xf]
      %v274 = vld [vmem:[%s1 + $0x14] sm:$0xf]
      %v275 = vld [vmem:[%s1 + $0x18] sm:$0xf]
      %v276 = vld [vmem:[%s1 + $0x1c] sm:$0xf]
      %v277 = vld [vmem:[%s1 + $0x20] sm:$0xf]
      %v278 = vld [vmem:[%s1 + $0x24] sm:$0xf]
      %v279 = vld [vmem:[%s1 + $0x28] sm:$0xf]
      %v280 = vld [vmem:[%s1 + $0x2c] sm:$0xf]
      %v281 = vld [vmem:[%s1 + $0x30] sm:$0xf]
      %v282 = vld [vmem:[%s1 + $0x34] sm:$0xf]
      %v283 = vld [vmem:[%s1 + $0x38] sm:$0xf]
      %v284 = vld [vmem:[%s1 + $0x3c] sm:$0xf]
      %v285 = vld [vmem:[%s1 + $0x40] sm:$0xf]
      %v286 = vld [vmem:[%s1 + $0x44] sm:$0xf]
      %v287 = vld [vmem:[%s1 + $0x48] sm:$0xf]
      %v288 = vld [vmem:[%s1 + $0x4c] sm:$0xf]
      %v289 = vld [vmem:[%s1 + $0x50] sm:$0xf]
      %v290 = vld [vmem:[%s1 + $0x54] sm:$0xf]
      %v291 = vld [vmem:[%s1 + $0x58] sm:$0xf]
      %v292 = vld [vmem:[%s1 + $0x5c] sm:$0xf]
      %v293 = vld [vmem:[%s1 + $0x60] sm:$0xf]
      %v294 = vld [vmem:[%s1 + $0x64] sm:$0xf]
      %v295 = vld [vmem:[%s2] sm:$0xff]
      %v296 = vld [vmem:[%s2 + $0x8] sm:$0xff]
      %v297 = vld [vmem:[%s2 + $0x10] sm:$0xff]
      %v298 = vld [vmem:[%s2 + $0x18] sm:$0xff]
      %v299 = vld [vmem:[%s2 + $0x20] sm:$0xff]
      %v300 = vld [vmem:[%s2 + $0x28] sm:$0xff]
      %v301 = vld [vmem:[%s2 + $0x30] sm:$0xff]
      %v302 = vld [vmem:[%s2 + $0x38] sm:$0xff]
      %v303 = vld [vmem:[%s2 + $0x40] sm:$0xff]
      %v304 = vld [vmem:[%s2 + $0x48] sm:$0xff]
      %v305 = vld [vmem:[%s2 + $0x50] sm:$0xff]
      %v306 = vld [vmem:[%s2 + $0x58] sm:$0xff]
      %v307 = vld [vmem:[%s2 + $0x60] sm:$0xff]
      %v308 = vld [vmem:[%s2 + $0x68] sm:$0xff]
      %v309 = vld [vmem:[%s2 + $0x70] sm:$0xff]
      %v310 = vld [vmem:[%s2 + $0x78] sm:$0xff]
      %v311 = vld [vmem:[%s2 + $0x80] sm:$0xff]
      %v312 = vld [vmem:[%s2 + $0x88] sm:$0xff]
      %v313 = vld [vmem:[%s2 + $0x90] sm:$0xff]
      %v314 = vld [vmem:[%s2 + $0x98] sm:$0xff]
      %v315 = vld [vmem:[%s2 + $0xa0] sm:$0xff]
      %v316 = vld [vmem:[%s2 + $0xa8] sm:$0xff]
      %v317 = vld [vmem:[%s2 + $0xb0] sm:$0xff]
      %v318 = vld [vmem:[%s2 + $0xb8] sm:$0xff]
      %v319 = vld [vmem:[%s2 + $0xc0] sm:$0xff]
      %v320 = vld [vmem:[%s2 + $0xc8] sm:$0xff]
      %322 = vset.pattern.permute.xlu0 0
      %323 = vperm.xlu0 %322, %v295
      %v324 = vpop.permute.xlu0 %323
      %327 = vset.pattern.permute.xlu0 0
      %328 = vperm.xlu0 %327, %v296
      %v329 = vpop.permute.xlu0 %328
      %332 = vset.pattern.permute.xlu0 0
      %333 = vperm.xlu0 %332, %v297
      %v334 = vpop.permute.xlu0 %333
      %337 = vset.pattern.permute.xlu0 0
      %338 = vperm.xlu0 %337, %v298
      %v339 = vpop.permute.xlu0 %338
      %342 = vset.pattern.permute.xlu0 0
      %343 = vperm.xlu0 %342, %v299
      %v344 = vpop.permute.xlu0 %343
      %347 = vset.pattern.permute.xlu0 0
      %348 = vperm.xlu0 %347, %v300
      %v349 = vpop.permute.xlu0 %348
      %352 = vset.pattern.permute.xlu0 0
      %353 = vperm.xlu0 %352, %v301
      %v354 = vpop.permute.xlu0 %353
      %357 = vset.pattern.permute.xlu0 0
      %358 = vperm.xlu0 %357, %v302
      %v359 = vpop.permute.xlu0 %358
      %362 = vset.pattern.permute.xlu0 0
      %363 = vperm.xlu0 %362, %v303
      %v364 = vpop.permute.xlu0 %363
      %367 = vset.pattern.permute.xlu0 0
      %368 = vperm.xlu0 %367, %v304
      %v369 = vpop.permute.xlu0 %368
      %372 = vset.pattern.permute.xlu0 0
      %373 = vperm.xlu0 %372, %v305
      %v374 = vpop.permute.xlu0 %373
      %377 = vset.pattern.permute.xlu0 0
      %378 = vperm.xlu0 %377, %v306
      %v379 = vpop.permute.xlu0 %378
      %382 = vset.pattern.permute.xlu0 0
      %383 = vperm.xlu0 %382, %v307
      %v384 = vpop.permute.xlu0 %383
      %387 = vset.pattern.permute.xlu0 0
      %388 = vperm.xlu0 %387, %v308
      %v389 = vpop.permute.xlu0 %388
      %392 = vset.pattern.permute.xlu0 0
      %393 = vperm.xlu0 %392, %v309
      %v394 = vpop.permute.xlu0 %393
      %397 = vset.pattern.permute.xlu0 0
      %398 = vperm.xlu0 %397, %v310
      %v399 = vpop.permute.xlu0 %398
      %402 = vset.pattern.permute.xlu0 0
      %403 = vperm.xlu0 %402, %v311
      %v404 = vpop.permute.xlu0 %403
      %407 = vset.pattern.permute.xlu0 0
      %408 = vperm.xlu0 %407, %v312
      %v409 = vpop.permute.xlu0 %408
      %412 = vset.pattern.permute.xlu0 0
      %413 = vperm.xlu0 %412, %v313
      %v414 = vpop.permute.xlu0 %413
      %417 = vset.pattern.permute.xlu0 0
      %418 = vperm.xlu0 %417, %v314
      %v419 = vpop.permute.xlu0 %418
      %422 = vset.pattern.permute.xlu0 0
      %423 = vperm.xlu0 %422, %v315
      %v424 = vpop.permute.xlu0 %423
      %427 = vset.pattern.permute.xlu0 0
      %428 = vperm.xlu0 %427, %v316
      %v429 = vpop.permute.xlu0 %428
      %432 = vset.pattern.permute.xlu0 0
      %433 = vperm.xlu0 %432, %v317
      %v434 = vpop.permute.xlu0 %433
      %437 = vset.pattern.permute.xlu0 0
      %438 = vperm.xlu0 %437, %v318
      %v439 = vpop.permute.xlu0 %438
      %442 = vset.pattern.permute.xlu0 0
      %443 = vperm.xlu0 %442, %v319
      %v444 = vpop.permute.xlu0 %443
      %447 = vset.pattern.permute.xlu0 0
      %448 = vperm.xlu0 %447, %v320
      %v449 = vpop.permute.xlu0 %448
      %v477 = vunpack.c.l.b16 %v269
      %v478 = vunpack.c.l.b16 %v270
      %v479 = vunpack.c.l.b16 %v271
      %v480 = vunpack.c.l.b16 %v272
      %v481 = vunpack.c.l.b16 %v273
      %v482 = vunpack.c.l.b16 %v274
      %v483 = vunpack.c.l.b16 %v275
      %v484 = vunpack.c.l.b16 %v276
      %v485 = vunpack.c.l.b16 %v277
      %v486 = vunpack.c.l.b16 %v278
      %v487 = vunpack.c.l.b16 %v279
      %v488 = vunpack.c.l.b16 %v280
      %v489 = vunpack.c.l.b16 %v281
      %v490 = vunpack.c.l.b16 %v282
      %v491 = vunpack.c.l.b16 %v283
      %v492 = vunpack.c.l.b16 %v284
      %v493 = vunpack.c.l.b16 %v285
      %v494 = vunpack.c.l.b16 %v286
      %v495 = vunpack.c.l.b16 %v287
      %v496 = vunpack.c.l.b16 %v288
      %v497 = vunpack.c.l.b16 %v289
      %v498 = vunpack.c.l.b16 %v290
      %v499 = vunpack.c.l.b16 %v291
      %v500 = vunpack.c.l.b16 %v292
      %v501 = vunpack.c.l.b16 %v293
      %v502 = vunpack.c.l.b16 %v294
      %v503 = vpack.c.b16 %v478, %v477
      %v504 = vpack.c.b16 %v480, %v479
      %v505 = vpack.c.b16 %v482, %v481
      %v506 = vpack.c.b16 %v484, %v483
      %v507 = vpack.c.b16 %v486, %v485
      %v508 = vpack.c.b16 %v488, %v487
      %v509 = vpack.c.b16 %v490, %v489
      %v510 = vpack.c.b16 %v492, %v491
      %v511 = vpack.c.b16 %v494, %v493
      %v512 = vpack.c.b16 %v496, %v495
      %v513 = vpack.c.b16 %v498, %v497
      %v514 = vpack.c.b16 %v500, %v499
      %v515 = vpack.c.b16 %v502, %v501
      %vm516 = vcmask 261120
      %v518 = vsel %vm516, %v503, 0
      %v521 = vsel %vm516, %v504, 0
      %v524 = vsel %vm516, %v505, 0
      %v527 = vsel %vm516, %v506, 0
      %v530 = vsel %vm516, %v507, 0
      %v533 = vsel %vm516, %v508, 0
      %v536 = vsel %vm516, %v509, 0
      %v539 = vsel %vm516, %v510, 0
      %v542 = vsel %vm516, %v511, 0
      %v545 = vsel %vm516, %v512, 0
      %v548 = vsel %vm516, %v513, 0
      %v551 = vsel %vm516, %v514, 0
      %v554 = vsel %vm516, %v515, 0
      %v557 = vsel %vm516, %v261, 0
      %v560 = vsel %vm516, %v262, 0
      %v563 = vsel %vm516, %v263, 0
      %v566 = vsel %vm516, %v264, 0
      %v569 = vsel %vm516, %v265, 0
      %v572 = vsel %vm516, %v266, 0
      %v575 = vsel %vm516, %v267, 0
      %v578 = vsel %vm516, %v268, 0
      %580 = vmatprep.subr.bf16.mxu0 0
      %581 = vmatpush1.bf16.xpose.msra.mxu0 %v578
      %582 = vmatprep.subr.bf16.mxu0 0
      %583 = vmatpush1.bf16.xpose.msra.mxu0 %v575
      %584 = vmatprep.subr.bf16.mxu0 0
      %585 = vmatpush1.bf16.xpose.msra.mxu0 %v572
      %586 = vmatprep.subr.bf16.mxu0 0
      %587 = vmatpush1.bf16.xpose.msra.mxu0 %v569
      %588 = vmatprep.subr.bf16.mxu0 0
      %589 = vmatpush1.bf16.xpose.msra.mxu0 %v566
      %590 = vmatprep.subr.bf16.mxu0 0
      %591 = vmatpush1.bf16.xpose.msra.mxu0 %v563
      %592 = vmatprep.subr.bf16.mxu0 0
      %593 = vmatpush1.bf16.xpose.msra.mxu0 %v560
      %594 = vmatprep.subr.bf16.mxu0 0
      %595 = vmatpush1.bf16.xpose.msra.mxu0 %v557
      %596 = vmatprep.subr.bf16.mxu0 0
      %597 = vmatpush2.bf16.xpose.msra.mxu0 0
      %598 = vmatprep.subr.bf16.mxu0 0
      %599 = vmatpush2.bf16.xpose.msra.mxu0 0
      %600 = vmatprep.subr.bf16.mxu0 0
      %601 = vmatpush2.bf16.xpose.msra.mxu0 0
      %602 = vmatprep.subr.bf16.mxu0 0
      %603 = vmatpush2.bf16.xpose.msra.mxu0 0
      %604 = vmatprep.subr.bf16.mxu0 0
      %605 = vmatpush2.bf16.xpose.msra.mxu0 0
      %606 = vmatprep.subr.bf16.mxu0 0
      %607 = vmatpush2.bf16.xpose.msra.mxu0 0
      %608 = vmatprep.subr.bf16.mxu0 0
      %609 = vmatpush2.bf16.xpose.msra.mxu0 0
      %610 = vmatprep.subr.bf16.mxu0 0
      %611 = vmatpush2.bf16.xpose.msra.mxu0 0
      %612 = vmatprep.mubr.bf16.mxu0 0
      %613 = vmatmul.mubr.bf16.gmra.mxu0 %v518
      %v614 = vpop.f32.mrf.mxu0
      %v615 = vadd.f32 %v324, %v614
      %v616 = vpop.f32.mrf.mxu0
      %v617 = vpop.f32.mrf.mxu0
      %v618 = vadd.f32 %v329, %v617
      %v619 = vpop.f32.mrf.mxu0
      %620 = vmatprep.mubr.bf16.mxu0 0
      %621 = vmatmul.mubr.bf16.gmra.mxu0 %v521
      %v622 = vpop.f32.mrf.mxu0
      %v623 = vadd.f32 %v334, %v622
      %v624 = vpop.f32.mrf.mxu0
      %v625 = vpop.f32.mrf.mxu0
      %v626 = vadd.f32 %v339, %v625
      %v627 = vpop.f32.mrf.mxu0
      %628 = vmatprep.mubr.bf16.mxu0 0
      %629 = vmatmul.mubr.bf16.gmra.mxu0 %v524
      %v630 = vpop.f32.mrf.mxu0
      %v631 = vadd.f32 %v344, %v630
      %v632 = vpop.f32.mrf.mxu0
      %v633 = vpop.f32.mrf.mxu0
      %v634 = vadd.f32 %v349, %v633
      %v635 = vpop.f32.mrf.mxu0
      %636 = vmatprep.mubr.bf16.mxu0 0
      %637 = vmatmul.mubr.bf16.gmra.mxu0 %v527
      %v638 = vpop.f32.mrf.mxu0
      %v639 = vadd.f32 %v354, %v638
      %v640 = vpop.f32.mrf.mxu0
      %v641 = vpop.f32.mrf.mxu0
      %v642 = vadd.f32 %v359, %v641
      %v643 = vpop.f32.mrf.mxu0
      %644 = vmatprep.mubr.bf16.mxu0 0
      %645 = vmatmul.mubr.bf16.gmra.mxu0 %v530
      %v646 = vpop.f32.mrf.mxu0
      %v647 = vadd.f32 %v364, %v646
      %v648 = vpop.f32.mrf.mxu0
      %v649 = vpop.f32.mrf.mxu0
      %v650 = vadd.f32 %v369, %v649
      %v651 = vpop.f32.mrf.mxu0
      %652 = vmatprep.mubr.bf16.mxu0 0
      %653 = vmatmul.mubr.bf16.gmra.mxu0 %v533
      %v654 = vpop.f32.mrf.mxu0
      %v655 = vadd.f32 %v374, %v654
      %v656 = vpop.f32.mrf.mxu0
      %v657 = vpop.f32.mrf.mxu0
      %v658 = vadd.f32 %v379, %v657
      %v659 = vpop.f32.mrf.mxu0
      %660 = vmatprep.mubr.bf16.mxu0 0
      %661 = vmatmul.mubr.bf16.gmra.mxu0 %v536
      %v662 = vpop.f32.mrf.mxu0
      %v663 = vadd.f32 %v384, %v662
      %v664 = vpop.f32.mrf.mxu0
      %v665 = vpop.f32.mrf.mxu0
      %v666 = vadd.f32 %v389, %v665
      %v667 = vpop.f32.mrf.mxu0
      %668 = vmatprep.mubr.bf16.mxu0 0
      %669 = vmatmul.mubr.bf16.gmra.mxu0 %v539
      %v670 = vpop.f32.mrf.mxu0
      %v671 = vadd.f32 %v394, %v670
      %v672 = vpop.f32.mrf.mxu0
      %v673 = vpop.f32.mrf.mxu0
      %v674 = vadd.f32 %v399, %v673
      %v675 = vpop.f32.mrf.mxu0
      %676 = vmatprep.mubr.bf16.mxu0 0
      %677 = vmatmul.mubr.bf16.gmra.mxu0 %v542
      %v678 = vpop.f32.mrf.mxu0
      %v679 = vadd.f32 %v404, %v678
      %v680 = vpop.f32.mrf.mxu0
      %v681 = vpop.f32.mrf.mxu0
      %v682 = vadd.f32 %v409, %v681
      %v683 = vpop.f32.mrf.mxu0
      %684 = vmatprep.mubr.bf16.mxu0 0
      %685 = vmatmul.mubr.bf16.gmra.mxu0 %v545
      %v686 = vpop.f32.mrf.mxu0
      %v687 = vadd.f32 %v414, %v686
      %v688 = vpop.f32.mrf.mxu0
      %v689 = vpop.f32.mrf.mxu0
      %v690 = vadd.f32 %v419, %v689
      %v691 = vpop.f32.mrf.mxu0
      %692 = vmatprep.mubr.bf16.mxu0 0
      %693 = vmatmul.mubr.bf16.gmra.mxu0 %v548
      %v694 = vpop.f32.mrf.mxu0
      %v695 = vadd.f32 %v424, %v694
      %v696 = vpop.f32.mrf.mxu0
      %v697 = vpop.f32.mrf.mxu0
      %v698 = vadd.f32 %v429, %v697
      %v699 = vpop.f32.mrf.mxu0
      %700 = vmatprep.mubr.bf16.mxu0 0
      %701 = vmatmul.mubr.bf16.gmra.mxu0 %v551
      %v702 = vpop.f32.mrf.mxu0
      %v703 = vadd.f32 %v434, %v702
      %v704 = vpop.f32.mrf.mxu0
      %v705 = vpop.f32.mrf.mxu0
      %v706 = vadd.f32 %v439, %v705
      %v707 = vpop.f32.mrf.mxu0
      %708 = vmatprep.mubr.bf16.mxu0 0
      %709 = vmatmul.mubr.bf16.gmra.mxu0 %v554
      %v710 = vpop.f32.mrf.mxu0
      %v711 = vadd.f32 %v444, %v710
      %v712 = vpop.f32.mrf.mxu0
      %v713 = vpop.f32.mrf.mxu0
      %v714 = vadd.f32 %v449, %v713
      %v715 = vpop.f32.mrf.mxu0
      %716 = vdwg.mxu0
      %v717 = vmax.f32 %v615, 0.0
      %v718 = vmax.f32 %v618, 0.0
      %v719 = vmax.f32 %v623, 0.0
      %v720 = vmax.f32 %v626, 0.0
      %v721 = vmax.f32 %v631, 0.0
      %v722 = vmax.f32 %v634, 0.0
      %v723 = vmax.f32 %v639, 0.0
      %v724 = vmax.f32 %v642, 0.0
      %v725 = vmax.f32 %v647, 0.0
      %v726 = vmax.f32 %v650, 0.0
      %v727 = vmax.f32 %v655, 0.0
      %v728 = vmax.f32 %v658, 0.0
      %v729 = vmax.f32 %v663, 0.0
      %v730 = vmax.f32 %v666, 0.0
      %v731 = vmax.f32 %v671, 0.0
      %v732 = vmax.f32 %v674, 0.0
      %v733 = vmax.f32 %v679, 0.0
      %v734 = vmax.f32 %v682, 0.0
      %v735 = vmax.f32 %v687, 0.0
      %v736 = vmax.f32 %v690, 0.0
      %v737 = vmax.f32 %v695, 0.0
      %v738 = vmax.f32 %v698, 0.0
      %v739 = vmax.f32 %v703, 0.0
      %v740 = vmax.f32 %v706, 0.0
      %v741 = vmax.f32 %v711, 0.0
      %v742 = vmax.f32 %v714, 0.0
      %v743 = vld [vmem:[%s3] sm:$0x3]
      %v744 = vpack.c.bf16 %v718, %v717
      %v745 = vpack.c.bf16 %v720, %v719
      %v746 = vpack.c.bf16 %v722, %v721
      %v747 = vpack.c.bf16 %v724, %v723
      %v748 = vpack.c.bf16 %v726, %v725
      %v749 = vpack.c.bf16 %v728, %v727
      %v750 = vpack.c.bf16 %v730, %v729
      %v751 = vpack.c.bf16 %v732, %v731
      %v752 = vpack.c.bf16 %v734, %v733
      %v753 = vpack.c.bf16 %v736, %v735
      %v754 = vpack.c.bf16 %v738, %v737
      %v755 = vpack.c.bf16 %v740, %v739
      %v756 = vpack.c.bf16 %v742, %v741
      %s757 = sld [smem:[#allocation2]]
      %v758 = vstv %s757
      %v761 = vunpack.c.l.s4 1966171168
      %v762 = vunpack.c.0.s8 %v761
      %v763 = vlaneseq
      %v764 = vshrl.u32 %v763, 7
      %v765 = vsub.s32 %v762, %v764
      %v766 = vrot.slane %v743, %v765
      %v767 = vcombine.high %v766, %v766
      %v769 = vunpack.c.l.s4 1966171168
      %v770 = vunpack.c.0.s8 %v769
      %v771 = vlaneseq
      %v772 = vshrl.u32 %v771, 7
      %v773 = vsub.s32 %v770, %v772
      %v774 = vrot.slane %v766, %v773
      %v776 = vunpack.c.l.s4 1966171168
      %v777 = vunpack.c.0.s8 %v776
      %v778 = vlaneseq
      %v779 = vshrl.u32 %v778, 7
      %v780 = vsub.s32 %v777, %v779
      %v781 = vrot.slane %v767, %v780
      %vm783 = vcmask 654336
      %v785 = vsel %vm783, %v781, 0
      %787 = vmatprep.subr.bf16.mxu0 0
      %788 = vmatpush1.bf16.msra.mxu0 %v751
      %789 = vmatprep.subr.bf16.mxu0 0
      %790 = vmatpush1.bf16.msra.mxu0 %v750
      %791 = vmatprep.subr.bf16.mxu0 0
      %792 = vmatpush1.bf16.msra.mxu0 %v749
      %793 = vmatprep.subr.bf16.mxu0 0
      %794 = vmatpush1.bf16.msra.mxu0 %v748
      %795 = vmatprep.subr.bf16.mxu0 0
      %796 = vmatpush1.bf16.msra.mxu0 %v747
      %797 = vmatprep.subr.bf16.mxu0 0
      %798 = vmatpush1.bf16.msra.mxu0 %v746
      %799 = vmatprep.subr.bf16.mxu0 0
      %800 = vmatpush1.bf16.msra.mxu0 %v745
      %801 = vmatprep.subr.bf16.mxu0 0
      %802 = vmatpush1.bf16.msra.mxu0 %v744
      %803 = vmatprep.subr.bf16.mxu0 0
      %804 = vmatpush2.bf16.msra.mxu0 0
      %805 = vmatprep.subr.bf16.mxu0 0
      %806 = vmatpush2.bf16.msra.mxu0 0
      %807 = vmatprep.subr.bf16.mxu0 0
      %808 = vmatpush2.bf16.msra.mxu0 0
      %809 = vmatprep.subr.bf16.mxu0 0
      %810 = vmatpush2.bf16.msra.mxu0 %v756
      %811 = vmatprep.subr.bf16.mxu0 0
      %812 = vmatpush2.bf16.msra.mxu0 %v755
      %813 = vmatprep.subr.bf16.mxu0 0
      %814 = vmatpush2.bf16.msra.mxu0 %v754
      %815 = vmatprep.subr.bf16.mxu0 0
      %816 = vmatpush2.bf16.msra.mxu0 %v753
      %817 = vmatprep.subr.bf16.mxu0 0
      %818 = vmatpush2.bf16.msra.mxu0 %v752
      %819 = vmatprep.mubr.bf16.mxu0 %v785
      %820 = vmatmul.mubr.bf16.gmra.mxu0 %v774
      %v821 = vpop.f32.mrf.mxu0
      %v822 = vadd.f32 %v758, %v821
      %v823 = vpop.f32.mrf.mxu0
      %v824 = vpop.f32.mrf.mxu0
      %v825 = vpop.f32.mrf.mxu0
      %826 = vdwg.mxu0
      %v827 = vsub.f32 0.0, %v822
      %v828 = vmul.f32 %v827, 1.442695
      %v829 = vpow.pop %v828
      %v830 = vadd.f32 %v829, 1.0
      %v831 = vrcp.pop %v830
      %832 = vst [vmem:[%s243] sm:$0x1] %v831
      %p833 = scmp.lt.s32.totalorder %s17, 1
      %s834 = scalar_select %p833, %s17, 1
      %s835 = scalar_lea.vmem %s5, %s834
      // Predicated region
      $region41: #{policy_net_forward.1} parent=39 // pred_check
        %p836 = pneg %p145
      $region42: #{policy_net_forward.1} parent=39 // pred_check_branch
        %838 = sbr.rel (%p836) target = $region44
      $region43: #{policy_net_forward.1} parent=39 // pred_region
        _
      $region44: #{policy_net_forward.1} parent=39 // pred_fallthru
        _
    $region40: #{policy_net_forward.1} parent=5 // pred_fallthru
      _
    %p839 = scmp.le.s32.totalorder 2, %s12
    // Predicated region
    $region45: #{policy_net_forward.1} parent=5 // pred_check
      %p840 = pneg %p839
    $region46: #{policy_net_forward.1} parent=5 // pred_check_branch
      %842 = sbr.rel (%p840) target = $region48
    $region47: #{policy_net_forward.1} parent=5 // pred_region
      %s843 = ssub.s32 %s12, 2
      // Predicated region
      $region49: #{policy_net_forward.1} parent=47 // pred_check
        %p844 = pneg %p151
      $region50: #{policy_net_forward.1} parent=47 // pred_check_branch
        %846 = sbr.rel (%p844) target = $region52
      $region51: #{policy_net_forward.1} parent=47 // pred_region
        %p847 = scmp.lt.s32.totalorder %s18, 1
        %s848 = scalar_select %p847, %s18, 1
        %s849 = scalar_lea.vmem %s5, %s848
      $region52: #{policy_net_forward.1} parent=47 // pred_fallthru
        _
    $region48: #{policy_net_forward.1} parent=5 // pred_fallthru
      _
  $region6: #{policy_net_forward.1} parent=0 // loop_footer
    %s16 = sadd.s32 1, %s12
  $region7: #{policy_net_forward.1} parent=0 // loop_footer_branch
    %11 = sbr.rel target = $region3
  $region8: #{policy_net_forward.1} parent=0 // loop_exit
    _

</llo_original>
